<compile_context>
chip_gen: v5e
topology: v5e:2x2
jax: 0.10.0
libtpu: 0.0.40
codegen_flags: <defaults>
</compile_context>

<pallas_src>
import jax
import jax.numpy as jnp
from jax.experimental import pallas as pl
from jax.experimental.pallas import tpu as pltpu


def _vae_kernel(
    x_ref, eps_ref,                              # bf16 activations
    ew1, eb1, ew2, eb2, ewh, ebh,                # encoder (fused [mu|logvar] head ewh/ebh, f32)
    dw1, db1, dw2, db2, dw3, db3,                # decoder
    recon_ref, mu_ref, logvar_ref,
):
    f32 = jnp.float32
    cdt = ew1.dtype                              # MXU operand dtype (bf16)
    Lp = mu_ref.shape[-1]

    # ---- encoder: Linear(D,256) -> ReLU -> Linear(256,128) -> ReLU
    x = x_ref[...]                               # already bf16 (cast fused into wrapper pad)
    h = jnp.dot(x, ew1[...], preferred_element_type=f32) + eb1[...]
    h = jnp.maximum(h, 0.0).astype(cdt)
    h = jnp.dot(h, ew2[...], preferred_element_type=f32) + eb2[...]
    h = jnp.maximum(h, 0.0)                      # keep f32 for the head (logvar precision)

    # ---- fused head: one matmul filling 2*Lp lanes, then 128-aligned (free) slices
    head = jnp.dot(h, ewh[...], preferred_element_type=f32) + ebh[...]
    mu = head[:, :Lp]
    logvar = head[:, Lp:]

    # ---- reparameterize: z = mu + eps * exp(0.5 * logvar)   (f32 elementwise, exp on EUP)
    std = jnp.exp(0.5 * logvar)
    z = (mu + eps_ref[...].astype(f32) * std).astype(cdt)

    # ---- decoder: Linear(L,128) -> ReLU -> Linear(128,256) -> ReLU -> Linear(256,D) -> Sigmoid
    d = jnp.dot(z, dw1[...], preferred_element_type=f32) + db1[...]
    d = jnp.maximum(d, 0.0).astype(cdt)
    d = jnp.dot(d, dw2[...], preferred_element_type=f32) + db2[...]
    d = jnp.maximum(d, 0.0).astype(cdt)
    logits = jnp.dot(d, dw3[...], preferred_element_type=f32) + db3[...]

    # sigmoid(x) == 0.5 * tanh(0.5 x) + 0.5 : runs on the EUP, stays exactly in [0, 1]
    recon_ref[...] = 0.5 * jnp.tanh(0.5 * logits) + 0.5
    mu_ref[...] = mu
    logvar_ref[...] = logvar


def _round_up(n, m):
    return ((n + m - 1) // m) * m


def prepare_params(params, input_dim, latent_dim, weight_dtype=jnp.bfloat16):
    """One-time layout plumbing (pure XLA, outside the kernel / outside the hot path):
    pad widths to 128-lane boundaries, fuse the [mu|logvar] head, cast matmul weights
    to bf16 (head kept f32 for logvar precision). Weights are stored [in, out]."""
    f32 = jnp.float32
    Dp = _round_up(input_dim, 128)
    Lp = _round_up(latent_dim, 128)
    ew1, eb1, ew2, eb2, ew3, eb3, dw1, db1, dw2, db2, dw3, db3 = params

    ew1p = jnp.pad(ew1, ((0, Dp - input_dim), (0, 0))).astype(weight_dtype)
    eb1p = eb1.astype(f32)
    ew2p = ew2.astype(weight_dtype)
    eb2p = eb2.astype(f32)
    # fused head: [128, 2*Lp], each half zero-padded to Lp lanes; kept f32.
    ewh = jnp.concatenate(
        [jnp.pad(ew3[:, :latent_dim], ((0, 0), (0, Lp - latent_dim))),
         jnp.pad(ew3[:, latent_dim:], ((0, 0), (0, Lp - latent_dim)))], axis=1).astype(f32)
    ebh = jnp.concatenate(
        [jnp.pad(eb3[:, :latent_dim], ((0, 0), (0, Lp - latent_dim))),
         jnp.pad(eb3[:, latent_dim:], ((0, 0), (0, Lp - latent_dim)))], axis=1).astype(f32)
    dw1p = jnp.pad(dw1, ((0, Lp - latent_dim), (0, 0))).astype(weight_dtype)
    db1p = db1.astype(f32)
    dw2p = dw2.astype(weight_dtype)
    db2p = db2.astype(f32)
    dw3p = jnp.pad(dw3, ((0, 0), (0, Dp - input_dim))).astype(weight_dtype)
    db3p = jnp.pad(db3, ((0, 0), (0, Dp - input_dim))).astype(f32)

    return (ew1p, eb1p, ew2p, eb2p, ewh, ebh, dw1p, db1p, dw2p, db2p, dw3p, db3p)


def vae_forward(x, eps, prepped_params, *, tile_b=512, act_dtype=jnp.bfloat16):
    """x: [B, input_dim] f32, eps: [B, latent_dim] f32 (the randn_like draw),
    prepped_params: output of prepare_params().
    Returns (recon [B, input_dim], mu [B, latent_dim], logvar [B, latent_dim])."""
    B, input_dim = x.shape
    latent_dim = eps.shape[1]
    f32 = jnp.float32

    Dp = _round_up(input_dim, 128)          # lane-dense input / recon width
    Lp = _round_up(latent_dim, 128)         # lane-dense latent width

    # batch tile: multiple of 16 sublanes (bf16 packing); cap so the grid has >= 2 steps
    # when B allows it (v7x dual-TC sharding of the "parallel" batch axis).
    tb = max(16, min(tile_b, _round_up(-(-B // 2), 16)))
    Bp = _round_up(B, tb)
    grid = (Bp // tb,)

    # pad + bf16 cast fused in one pass; skipped entirely when shapes already align.
    if (Bp, Dp) == (B, input_dim):
        xp = x.astype(act_dtype)
    else:
        xp = jnp.pad(x.astype(f32), ((0, Bp - B), (0, Dp - input_dim))).astype(act_dtype)
    if (Bp, Lp) == (B, latent_dim):
        epsp = eps.astype(act_dtype)
    else:
        epsp = jnp.pad(eps.astype(f32), ((0, Bp - B), (0, Lp - latent_dim))).astype(act_dtype)

    def act_spec(lanes):
        return pl.BlockSpec((tb, lanes), lambda i: (i, 0))

    def resident_spec(w):
        # full-array block, constant block index -> DMA'd once, stays resident in VMEM
        return pl.BlockSpec(w.shape, lambda i: (0, 0))

    # explicit scoped-VMEM budget: 2x (double-buffered streamed tiles) + weights + slack
    streamed_tile_bytes = (tb * Dp + tb * Lp) * 2 + (tb * Dp + 2 * tb * Lp) * 4
    weight_bytes = sum(int(w.size) * w.dtype.itemsize for w in prepped_params)
    vmem_est = 2 * streamed_tile_bytes + 2 * weight_bytes + (4 << 20)
    vmem_limit = int(min(max(vmem_est, 16 << 20), 48 << 20))

    # advisory cost hint for XLA scheduling
    flops = 2 * Bp * (Dp * 256 + 256 * 128 + 128 * 2 * Lp
                      + Lp * 128 + 128 * 256 + 256 * Dp)
    transcendentals = Bp * (Lp + Dp)
    bytes_accessed = (int(xp.size) * 2 + int(epsp.size) * 2 + weight_bytes
                      + Bp * (Dp + 2 * Lp) * 4)

    recon_p, mu_p, logvar_p = pl.pallas_call(
        _vae_kernel,
        out_shape=(
            jax.ShapeDtypeStruct((Bp, Dp), f32),
            jax.ShapeDtypeStruct((Bp, Lp), f32),
            jax.ShapeDtypeStruct((Bp, Lp), f32),
        ),
        grid_spec=pltpu.PrefetchScalarGridSpec(
            num_scalar_prefetch=0,
            grid=grid,
            in_specs=[act_spec(Dp), act_spec(Lp)]
                     + [resident_spec(w) for w in prepped_params],
            out_specs=[act_spec(Dp), act_spec(Lp), act_spec(Lp)],
        ),
        compiler_params=pltpu.CompilerParams(
            dimension_semantics=("parallel",),
            vmem_limit_bytes=vmem_limit),
        cost_estimate=pl.CostEstimate(flops=int(flops),
                                      transcendentals=int(transcendentals),
                                      bytes_accessed=int(bytes_accessed)),
    )(xp, epsp, *prepped_params)

    if (Bp, Dp, Lp) == (B, input_dim, latent_dim):
        return recon_p, mu_p, logvar_p
    return (recon_p[:B, :input_dim],
            mu_p[:B, :latent_dim],
            logvar_p[:B, :latent_dim])


def init_params(key, input_dim, latent_dim):
    """Deterministic init mirroring nn.Linear defaults (uniform +-1/sqrt(fan_in)).
    Weights stored as [in, out] (transposed vs torch); biases as [1, out]."""
    dims = [
        (input_dim, 256), (256, 128), (128, 2 * latent_dim),     # encoder
        (latent_dim, 128), (128, 256), (256, input_dim),         # decoder
    ]
    params = []
    for fan_in, fan_out in dims:
        key, kw, kb = jax.random.split(key, 3)
        bound = 1.0 / jnp.sqrt(fan_in)
        w = jax.random.uniform(kw, (fan_in, fan_out), jnp.float32, -bound, bound)
        b = jax.random.uniform(kb, (1, fan_out), jnp.float32, -bound, bound)
        params += [w, b]
    return params


def vae_reference(x, eps, params):
    """Pure-JAX reference (f32) of the PyTorch forward, for correctness checks."""
    ew1, eb1, ew2, eb2, ew3, eb3, dw1, db1, dw2, db2, dw3, db3 = params
    h = jax.nn.relu(x @ ew1 + eb1)
    h = jax.nn.relu(h @ ew2 + eb2)
    h = h @ ew3 + eb3
    latent = eps.shape[1]
    mu, logvar = h[:, :latent], h[:, latent:]
    z = mu + eps * jnp.exp(0.5 * logvar)
    d = jax.nn.relu(z @ dw1 + db1)
    d = jax.nn.relu(d @ dw2 + db2)
    recon = jax.nn.sigmoid(d @ dw3 + db3)
    return recon, mu, logvar


if __name__ == "__main__":
    B, INPUT_DIM, LATENT_DIM = 8, 64, 16

    key = jax.random.PRNGKey(0)
    kx, keps, kparams = jax.random.split(key, 3)

    x = jax.random.uniform(kx, (B, INPUT_DIM), jnp.float32)        # data in [0,1)
    eps = jax.random.normal(keps, (B, LATENT_DIM), jnp.float32)    # reparam noise
    params = init_params(kparams, INPUT_DIM, LATENT_DIM)

    # one-time weight layout prep (hoisted out of the per-call path)
    prepped = prepare_params(params, INPUT_DIM, LATENT_DIM)

    fwd = jax.jit(vae_forward)
    recon, mu, logvar = fwd(x, eps, prepped)
    jax.block_until_ready((recon, mu, logvar))

    r_recon, r_mu, r_logvar = vae_reference(x, eps, params)

    assert recon.shape == (B, INPUT_DIM)
    assert mu.shape == (B, LATENT_DIM) and logvar.shape == (B, LATENT_DIM)
    assert bool(jnp.all((recon >= -1e-6) & (recon <= 1.0 + 1e-6)))
    assert bool(jnp.max(jnp.abs(recon - r_recon)) < 0.1)
    assert bool(jnp.max(jnp.abs(mu - r_mu)) < 0.1)
    assert bool(jnp.max(jnp.abs(logvar - r_logvar)) < 0.1)
    print("KERNEL_OK")
</pallas_src>

<mosaic_0001>
module attributes {stable_mosaic.version = 11 : i64} {
  func.func @_vae_kernel(%arg0: i32, %arg1: memref<16x128xbf16, #tpu.memory_space<vmem>>, %arg2: memref<16x128xbf16, #tpu.memory_space<vmem>>, %arg3: memref<128x256xbf16, #tpu.memory_space<vmem>>, %arg4: memref<1x256xf32, #tpu.memory_space<vmem>>, %arg5: memref<256x128xbf16, #tpu.memory_space<vmem>>, %arg6: memref<1x128xf32, #tpu.memory_space<vmem>>, %arg7: memref<128x256xf32, #tpu.memory_space<vmem>>, %arg8: memref<1x256xf32, #tpu.memory_space<vmem>>, %arg9: memref<128x128xbf16, #tpu.memory_space<vmem>>, %arg10: memref<1x128xf32, #tpu.memory_space<vmem>>, %arg11: memref<128x256xbf16, #tpu.memory_space<vmem>>, %arg12: memref<1x256xf32, #tpu.memory_space<vmem>>, %arg13: memref<256x128xbf16, #tpu.memory_space<vmem>>, %arg14: memref<1x128xf32, #tpu.memory_space<vmem>>, %arg15: memref<16x128xf32, #tpu.memory_space<vmem>>, %arg16: memref<16x128xf32, #tpu.memory_space<vmem>>, %arg17: memref<16x128xf32, #tpu.memory_space<vmem>>) attributes {dimension_semantics = [#tpu.dimension_semantics<parallel>], iteration_bounds = array<i64: 1>, scalar_prefetch = 0 : i64, scratch_operands = 0 : i64, tpu.core_type = #tpu.core_type<tc>, window_params = [{transform_indices = @transform_0, window_bounds = array<i64: 16, 128>}, {transform_indices = @transform_1, window_bounds = array<i64: 16, 128>}, {pipeline_mode = #tpu.pipeline_mode<synchronous>, transform_indices = @transform_2, window_bounds = array<i64: 128, 256>}, {pipeline_mode = #tpu.pipeline_mode<synchronous>, transform_indices = @transform_3, window_bounds = array<i64: 1, 256>}, {pipeline_mode = #tpu.pipeline_mode<synchronous>, transform_indices = @transform_4, window_bounds = array<i64: 256, 128>}, {pipeline_mode = #tpu.pipeline_mode<synchronous>, transform_indices = @transform_5, window_bounds = array<i64: 1, 128>}, {pipeline_mode = #tpu.pipeline_mode<synchronous>, transform_indices = @transform_6, window_bounds = array<i64: 128, 256>}, {pipeline_mode = #tpu.pipeline_mode<synchronous>, transform_indices = @transform_7, window_bounds = array<i64: 1, 256>}, {pipeline_mode = #tpu.pipeline_mode<synchronous>, transform_indices = @transform_8, window_bounds = array<i64: 128, 128>}, {pipeline_mode = #tpu.pipeline_mode<synchronous>, transform_indices = @transform_9, window_bounds = array<i64: 1, 128>}, {pipeline_mode = #tpu.pipeline_mode<synchronous>, transform_indices = @transform_10, window_bounds = array<i64: 128, 256>}, {pipeline_mode = #tpu.pipeline_mode<synchronous>, transform_indices = @transform_11, window_bounds = array<i64: 1, 256>}, {pipeline_mode = #tpu.pipeline_mode<synchronous>, transform_indices = @transform_12, window_bounds = array<i64: 256, 128>}, {pipeline_mode = #tpu.pipeline_mode<synchronous>, transform_indices = @transform_13, window_bounds = array<i64: 1, 128>}, {transform_indices = @transform_14, window_bounds = array<i64: 16, 128>}, {transform_indices = @transform_15, window_bounds = array<i64: 16, 128>}, {transform_indices = @transform_16, window_bounds = array<i64: 16, 128>}]} {
    %c0 = arith.constant 0 : index
    %c0_0 = arith.constant 0 : index
    %0 = vector.load %arg1[%c0, %c0_0] : memref<16x128xbf16, #tpu.memory_space<vmem>>, vector<16x128xbf16>
    %c0_1 = arith.constant 0 : index
    %c0_2 = arith.constant 0 : index
    %1 = vector.load %arg3[%c0_1, %c0_2] : memref<128x256xbf16, #tpu.memory_space<vmem>>, vector<128x256xbf16>
    %cst = arith.constant dense<0.000000e+00> : vector<16x256xf32>
    %2 = tpu.matmul %0, %1, %cst {dimension_numbers = #tpu.dot_dimension_numbers<[1], [0], [0], [1], [0, 0, 1, 1], [], []>} : vector<16x128xbf16>, vector<128x256xbf16>, vector<16x256xf32> -> vector<16x256xf32>
    %c0_3 = arith.constant 0 : index
    %c0_4 = arith.constant 0 : index
    %3 = vector.load %arg4[%c0_3, %c0_4] : memref<1x256xf32, #tpu.memory_space<vmem>>, vector<1x256xf32>
    %4 = vector.broadcast %3 : vector<1x256xf32> to vector<16x256xf32>
    %5 = arith.addf %2, %4 : vector<16x256xf32>
    %cst_5 = arith.constant 0.000000e+00 : f32
    %6 = vector.broadcast %cst_5 : f32 to vector<16x256xf32>
    %7 = arith.maximumf %5, %6 : vector<16x256xf32>
    %8 = arith.truncf %7 : vector<16x256xf32> to vector<16x256xbf16>
    %c0_6 = arith.constant 0 : index
    %c0_7 = arith.constant 0 : index
    %9 = vector.load %arg5[%c0_6, %c0_7] : memref<256x128xbf16, #tpu.memory_space<vmem>>, vector<256x128xbf16>
    %cst_8 = arith.constant dense<0.000000e+00> : vector<16x128xf32>
    %10 = tpu.matmul %8, %9, %cst_8 {dimension_numbers = #tpu.dot_dimension_numbers<[1], [0], [0], [1], [0, 0, 1, 1], [], []>} : vector<16x256xbf16>, vector<256x128xbf16>, vector<16x128xf32> -> vector<16x128xf32>
    %c0_9 = arith.constant 0 : index
    %c0_10 = arith.constant 0 : index
    %11 = vector.load %arg6[%c0_9, %c0_10] : memref<1x128xf32, #tpu.memory_space<vmem>>, vector<1x128xf32>
    %12 = vector.broadcast %11 : vector<1x128xf32> to vector<16x128xf32>
    %13 = arith.addf %10, %12 : vector<16x128xf32>
    %cst_11 = arith.constant 0.000000e+00 : f32
    %14 = vector.broadcast %cst_11 : f32 to vector<16x128xf32>
    %15 = arith.maximumf %13, %14 : vector<16x128xf32>
    %c0_12 = arith.constant 0 : index
    %c0_13 = arith.constant 0 : index
    %16 = vector.load %arg7[%c0_12, %c0_13] : memref<128x256xf32, #tpu.memory_space<vmem>>, vector<128x256xf32>
    %cst_14 = arith.constant dense<0.000000e+00> : vector<16x256xf32>
    %17 = tpu.matmul %15, %16, %cst_14 {dimension_numbers = #tpu.dot_dimension_numbers<[1], [0], [0], [1], [0, 0, 1, 1], [], []>} : vector<16x128xf32>, vector<128x256xf32>, vector<16x256xf32> -> vector<16x256xf32>
    %c0_15 = arith.constant 0 : index
    %c0_16 = arith.constant 0 : index
    %18 = vector.load %arg8[%c0_15, %c0_16] : memref<1x256xf32, #tpu.memory_space<vmem>>, vector<1x256xf32>
    %19 = vector.broadcast %18 : vector<1x256xf32> to vector<16x256xf32>
    %20 = arith.addf %17, %19 : vector<16x256xf32>
    %21 = vector.extract_strided_slice %20 {offsets = [0, 0], sizes = [16, 128], strides = [1, 1]} : vector<16x256xf32> to vector<16x128xf32>
    %22 = vector.extract_strided_slice %20 {offsets = [0, 128], sizes = [16, 128], strides = [1, 1]} : vector<16x256xf32> to vector<16x128xf32>
    %cst_17 = arith.constant 5.000000e-01 : f32
    %23 = vector.broadcast %cst_17 : f32 to vector<16x128xf32>
    %24 = arith.mulf %23, %22 : vector<16x128xf32>
    %25 = math.exp %24 : vector<16x128xf32>
    %c0_18 = arith.constant 0 : index
    %c0_19 = arith.constant 0 : index
    %26 = vector.load %arg2[%c0_18, %c0_19] : memref<16x128xbf16, #tpu.memory_space<vmem>>, vector<16x128xbf16>
    %27 = arith.extf %26 : vector<16x128xbf16> to vector<16x128xf32>
    %28 = arith.mulf %27, %25 : vector<16x128xf32>
    %29 = arith.addf %21, %28 : vector<16x128xf32>
    %30 = arith.truncf %29 : vector<16x128xf32> to vector<16x128xbf16>
    %c0_20 = arith.constant 0 : index
    %c0_21 = arith.constant 0 : index
    %31 = vector.load %arg9[%c0_20, %c0_21] : memref<128x128xbf16, #tpu.memory_space<vmem>>, vector<128x128xbf16>
    %cst_22 = arith.constant dense<0.000000e+00> : vector<16x128xf32>
    %32 = tpu.matmul %30, %31, %cst_22 {dimension_numbers = #tpu.dot_dimension_numbers<[1], [0], [0], [1], [0, 0, 1, 1], [], []>} : vector<16x128xbf16>, vector<128x128xbf16>, vector<16x128xf32> -> vector<16x128xf32>
    %c0_23 = arith.constant 0 : index
    %c0_24 = arith.constant 0 : index
    %33 = vector.load %arg10[%c0_23, %c0_24] : memref<1x128xf32, #tpu.memory_space<vmem>>, vector<1x128xf32>
    %34 = vector.broadcast %33 : vector<1x128xf32> to vector<16x128xf32>
    %35 = arith.addf %32, %34 : vector<16x128xf32>
    %cst_25 = arith.constant 0.000000e+00 : f32
    %36 = vector.broadcast %cst_25 : f32 to vector<16x128xf32>
    %37 = arith.maximumf %35, %36 : vector<16x128xf32>
    %38 = arith.truncf %37 : vector<16x128xf32> to vector<16x128xbf16>
    %c0_26 = arith.constant 0 : index
    %c0_27 = arith.constant 0 : index
    %39 = vector.load %arg11[%c0_26, %c0_27] : memref<128x256xbf16, #tpu.memory_space<vmem>>, vector<128x256xbf16>
    %cst_28 = arith.constant dense<0.000000e+00> : vector<16x256xf32>
    %40 = tpu.matmul %38, %39, %cst_28 {dimension_numbers = #tpu.dot_dimension_numbers<[1], [0], [0], [1], [0, 0, 1, 1], [], []>} : vector<16x128xbf16>, vector<128x256xbf16>, vector<16x256xf32> -> vector<16x256xf32>
    %c0_29 = arith.constant 0 : index
    %c0_30 = arith.constant 0 : index
    %41 = vector.load %arg12[%c0_29, %c0_30] : memref<1x256xf32, #tpu.memory_space<vmem>>, vector<1x256xf32>
    %42 = vector.broadcast %41 : vector<1x256xf32> to vector<16x256xf32>
    %43 = arith.addf %40, %42 : vector<16x256xf32>
    %cst_31 = arith.constant 0.000000e+00 : f32
    %44 = vector.broadcast %cst_31 : f32 to vector<16x256xf32>
    %45 = arith.maximumf %43, %44 : vector<16x256xf32>
    %46 = arith.truncf %45 : vector<16x256xf32> to vector<16x256xbf16>
    %c0_32 = arith.constant 0 : index
    %c0_33 = arith.constant 0 : index
    %47 = vector.load %arg13[%c0_32, %c0_33] : memref<256x128xbf16, #tpu.memory_space<vmem>>, vector<256x128xbf16>
    %cst_34 = arith.constant dense<0.000000e+00> : vector<16x128xf32>
    %48 = tpu.matmul %46, %47, %cst_34 {dimension_numbers = #tpu.dot_dimension_numbers<[1], [0], [0], [1], [0, 0, 1, 1], [], []>} : vector<16x256xbf16>, vector<256x128xbf16>, vector<16x128xf32> -> vector<16x128xf32>
    %c0_35 = arith.constant 0 : index
    %c0_36 = arith.constant 0 : index
    %49 = vector.load %arg14[%c0_35, %c0_36] : memref<1x128xf32, #tpu.memory_space<vmem>>, vector<1x128xf32>
    %50 = vector.broadcast %49 : vector<1x128xf32> to vector<16x128xf32>
    %51 = arith.addf %48, %50 : vector<16x128xf32>
    %cst_37 = arith.constant 5.000000e-01 : f32
    %52 = vector.broadcast %cst_37 : f32 to vector<16x128xf32>
    %53 = arith.mulf %52, %51 : vector<16x128xf32>
    %54 = math.tanh %53 : vector<16x128xf32>
    %cst_38 = arith.constant 5.000000e-01 : f32
    %55 = vector.broadcast %cst_38 : f32 to vector<16x128xf32>
    %56 = arith.mulf %55, %54 : vector<16x128xf32>
    %cst_39 = arith.constant 5.000000e-01 : f32
    %57 = vector.broadcast %cst_39 : f32 to vector<16x128xf32>
    %58 = arith.addf %56, %57 : vector<16x128xf32>
    %c0_40 = arith.constant 0 : index
    %c0_41 = arith.constant 0 : index
    %59 = vector.load %arg15[%c0_40, %c0_41] : memref<16x128xf32, #tpu.memory_space<vmem>>, vector<16x128xf32>
    tpu.vector_store %arg15[%c0_40, %c0_41], %58 {strides = array<i32>} : memref<16x128xf32, #tpu.memory_space<vmem>>, vector<16x128xf32>,
    %c0_42 = arith.constant 0 : index
    %c0_43 = arith.constant 0 : index
    %60 = vector.load %arg16[%c0_42, %c0_43] : memref<16x128xf32, #tpu.memory_space<vmem>>, vector<16x128xf32>
    tpu.vector_store %arg16[%c0_42, %c0_43], %21 {strides = array<i32>} : memref<16x128xf32, #tpu.memory_space<vmem>>, vector<16x128xf32>,
    %c0_44 = arith.constant 0 : index
    %c0_45 = arith.constant 0 : index
    %61 = vector.load %arg17[%c0_44, %c0_45] : memref<16x128xf32, #tpu.memory_space<vmem>>, vector<16x128xf32>
    tpu.vector_store %arg17[%c0_44, %c0_45], %22 {strides = array<i32>} : memref<16x128xf32, #tpu.memory_space<vmem>>, vector<16x128xf32>,
    return
  }
  func.func @transform_0(%arg0: i32) -> (i32, i32) {
    %c0_i32 = arith.constant 0 : i32
    %c0_i32_0 = arith.constant 0 : i32
    return %arg0, %c0_i32 : i32, i32
  }
  func.func @transform_1(%arg0: i32) -> (i32, i32) {
    %c0_i32 = arith.constant 0 : i32
    %c0_i32_0 = arith.constant 0 : i32
    return %arg0, %c0_i32 : i32, i32
  }
  func.func @transform_2(%arg0: i32) -> (i32, i32) {
    %c0_i32 = arith.constant 0 : i32
    %c0_i32_0 = arith.constant 0 : i32
    %c0_i32_1 = arith.constant 0 : i32
    return %c0_i32, %c0_i32_0 : i32, i32
  }
  func.func @transform_3(%arg0: i32) -> (i32, i32) {
    %c0_i32 = arith.constant 0 : i32
    %c0_i32_0 = arith.constant 0 : i32
    %c0_i32_1 = arith.constant 0 : i32
    return %c0_i32, %c0_i32_0 : i32, i32
  }
  func.func @transform_4(%arg0: i32) -> (i32, i32) {
    %c0_i32 = arith.constant 0 : i32
    %c0_i32_0 = arith.constant 0 : i32
    %c0_i32_1 = arith.constant 0 : i32
    return %c0_i32, %c0_i32_0 : i32, i32
  }
  func.func @transform_5(%arg0: i32) -> (i32, i32) {
    %c0_i32 = arith.constant 0 : i32
    %c0_i32_0 = arith.constant 0 : i32
    %c0_i32_1 = arith.constant 0 : i32
    return %c0_i32, %c0_i32_0 : i32, i32
  }
  func.func @transform_6(%arg0: i32) -> (i32, i32) {
    %c0_i32 = arith.constant 0 : i32
    %c0_i32_0 = arith.constant 0 : i32
    %c0_i32_1 = arith.constant 0 : i32
    return %c0_i32, %c0_i32_0 : i32, i32
  }
  func.func @transform_7(%arg0: i32) -> (i32, i32) {
    %c0_i32 = arith.constant 0 : i32
    %c0_i32_0 = arith.constant 0 : i32
    %c0_i32_1 = arith.constant 0 : i32
    return %c0_i32, %c0_i32_0 : i32, i32
  }
  func.func @transform_8(%arg0: i32) -> (i32, i32) {
    %c0_i32 = arith.constant 0 : i32
    %c0_i32_0 = arith.constant 0 : i32
    %c0_i32_1 = arith.constant 0 : i32
    return %c0_i32, %c0_i32_0 : i32, i32
  }
  func.func @transform_9(%arg0: i32) -> (i32, i32) {
    %c0_i32 = arith.constant 0 : i32
    %c0_i32_0 = arith.constant 0 : i32
    %c0_i32_1 = arith.constant 0 : i32
    return %c0_i32, %c0_i32_0 : i32, i32
  }
  func.func @transform_10(%arg0: i32) -> (i32, i32) {
    %c0_i32 = arith.constant 0 : i32
    %c0_i32_0 = arith.constant 0 : i32
    %c0_i32_1 = arith.constant 0 : i32
    return %c0_i32, %c0_i32_0 : i32, i32
  }
  func.func @transform_11(%arg0: i32) -> (i32, i32) {
    %c0_i32 = arith.constant 0 : i32
    %c0_i32_0 = arith.constant 0 : i32
    %c0_i32_1 = arith.constant 0 : i32
    return %c0_i32, %c0_i32_0 : i32, i32
  }
  func.func @transform_12(%arg0: i32) -> (i32, i32) {
    %c0_i32 = arith.constant 0 : i32
    %c0_i32_0 = arith.constant 0 : i32
    %c0_i32_1 = arith.constant 0 : i32
    return %c0_i32, %c0_i32_0 : i32, i32
  }
  func.func @transform_13(%arg0: i32) -> (i32, i32) {
    %c0_i32 = arith.constant 0 : i32
    %c0_i32_0 = arith.constant 0 : i32
    %c0_i32_1 = arith.constant 0 : i32
    return %c0_i32, %c0_i32_0 : i32, i32
  }
  func.func @transform_14(%arg0: i32) -> (i32, i32) {
    %c0_i32 = arith.constant 0 : i32
    %c0_i32_0 = arith.constant 0 : i32
    return %arg0, %c0_i32 : i32, i32
  }
  func.func @transform_15(%arg0: i32) -> (i32, i32) {
    %c0_i32 = arith.constant 0 : i32
    %c0_i32_0 = arith.constant 0 : i32
    return %arg0, %c0_i32 : i32, i32
  }
  func.func @transform_16(%arg0: i32) -> (i32, i32) {
    %c0_i32 = arith.constant 0 : i32
    %c0_i32_0 = arith.constant 0 : i32
    return %arg0, %c0_i32 : i32, i32
  }
}

</mosaic_0001>

<llo_original>
// kernel: vae_forward.1
$region0: #{vae_forward.1}
  #allocation0 [shape = 'u32[]', space=smem, size = 0x4, offset = 0x4, fixed_abs, tag = 'smem constant byte address 0x4 - core index']
  #allocation1 [shape = 'u32[72,128]{1,0:T(1,128)}', space=vmem, size = 0x9000, scoped, tag = 'internal scratch']
  %s0 = inlined_call_operand.vmem [shape: bf16[16,128], index: 0, kind: input, shape index: {}]
  %s1 = inlined_call_operand.vmem [shape: bf16[16,128], index: 1, kind: input, shape index: {}]
  %s2 = inlined_call_operand.hbm [shape: bf16[128,256], index: 2, kind: input, shape index: {}]
  %s3 = inlined_call_operand.vmem [shape: f32[1,256], index: 3, kind: input, shape index: {}]
  %s4 = inlined_call_operand.hbm [shape: bf16[256,128], index: 4, kind: input, shape index: {}]
  %s5 = inlined_call_operand.vmem [shape: f32[1,128], index: 5, kind: input, shape index: {}]
  %s6 = inlined_call_operand.hbm [shape: f32[128,256], index: 6, kind: input, shape index: {}]
  %s7 = inlined_call_operand.vmem [shape: f32[1,256], index: 7, kind: input, shape index: {}]
  %s8 = inlined_call_operand.hbm [shape: bf16[128,128], index: 8, kind: input, shape index: {}]
  %s9 = inlined_call_operand.vmem [shape: f32[1,128], index: 9, kind: input, shape index: {}]
  %s10 = inlined_call_operand.hbm [shape: bf16[128,256], index: 10, kind: input, shape index: {}]
  %s11 = inlined_call_operand.vmem [shape: f32[1,256], index: 11, kind: input, shape index: {}]
  %s12 = inlined_call_operand.hbm [shape: bf16[256,128], index: 12, kind: input, shape index: {}]
  %s13 = inlined_call_operand.vmem [shape: f32[1,128], index: 13, kind: input, shape index: {}]
  %s14 = inlined_call_operand.vmem [shape: f32[16,128], index: 14, kind: output, shape index: {0}]
  %s15 = inlined_call_operand.vmem [shape: f32[16,128], index: 15, kind: output, shape index: {1}]
  %s16 = inlined_call_operand.vmem [shape: f32[16,128], index: 16, kind: output, shape index: {2}]
  %17 = xla_tuple %s14, %s15, %s16
  %s18 = sld [smem:[#allocation0]]
  $region106: #{vae_forward.1} parent=0
    _
  %s20 = ssub.s32 1, %s18
  %s21 = scalar_select 0, %s20, %s18
  $region1: #{vae_forward.1} parent=0
    #allocation2 [shape = 'u8[65536]{0}', space=vmem, size = 0x10000, scoped, tag = 'input window, operand 2, single buffered']
    #allocation3 [shape = 's32[1]{0}', space=sflag, size = 0x4, scoped, tag = 'scoped memory for vae_forward.1']
    #allocation4 [shape = 'u8[65536]{0}', space=vmem, size = 0x10000, scoped, tag = 'input window, operand 4, single buffered']
    #allocation5 [shape = 's32[1]{0}', space=sflag, size = 0x4, scoped, tag = 'scoped memory for vae_forward.1']
    #allocation6 [shape = 'u8[131072]{0}', space=vmem, size = 0x20000, scoped, tag = 'input window, operand 6, single buffered']
    #allocation7 [shape = 'u8[32768]{0}', space=vmem, size = 0x8000, scoped, tag = 'input window, operand 8, single buffered']
    #allocation8 [shape = 's32[1]{0}', space=sflag, size = 0x4, scoped, tag = 'scoped memory for vae_forward.1']
    #allocation9 [shape = 'u8[65536]{0}', space=vmem, size = 0x10000, scoped, tag = 'input window, operand 10, single buffered']
    #allocation10 [shape = 'u8[65536]{0}', space=vmem, size = 0x10000, scoped, tag = 'input window, operand 12, single buffered']
    #allocation11 [shape = 's32[1]{0}', space=sflag, size = 0x4, scoped, tag = 'scoped memory for vae_forward.1']
    %22 = vsyncpa [#allocation3], 0
    %23 = vsyncpa [#allocation5], 0
    %24 = vsyncpa [#allocation8], 0
    %25 = vsyncpa [#allocation11], 0
    // Predicated region
    $region2: #{vae_forward.1} parent=1 // pred_check
      _
    $region3: #{vae_forward.1} parent=1 // pred_check_branch
      %27 = sbr.rel (0) target = $region5
    $region4: #{vae_forward.1} parent=1 // pred_region
      _
    $region5: #{vae_forward.1} parent=1 // pred_fallthru
      _
    // Predicated region
    $region6: #{vae_forward.1} parent=1 // pred_check
      _
    $region7: #{vae_forward.1} parent=1 // pred_check_branch
      %29 = sbr.rel (0) target = $region9
    $region8: #{vae_forward.1} parent=1 // pred_region
      _
    $region9: #{vae_forward.1} parent=1 // pred_fallthru
      _
    // Predicated region
    $region10: #{vae_forward.1} parent=1 // pred_check
      _
    $region11: #{vae_forward.1} parent=1 // pred_check_branch
      %31 = sbr.rel (0) target = $region13
    $region12: #{vae_forward.1} parent=1 // pred_region
      %33 = vsyncadd [#allocation3], 0
      %s34 = sshll.u32 %s2, 4
      %s35 = int_to_ptr.hbm [resolvable:$true] %s34
      %s36 = sshll.u32 [#allocation2], 4
      %s37 = int_to_ptr.vmem [resolvable:$true] %s36
      %42 = dma.hbm_to_vmem [thread:$0]  %s35, 2048, %s37, [#allocation3], 128, 128, 8
    $region13: #{vae_forward.1} parent=1 // pred_fallthru
      _
    // Predicated region
    $region14: #{vae_forward.1} parent=1 // pred_check
      _
    $region15: #{vae_forward.1} parent=1 // pred_check_branch
      %44 = sbr.rel (0) target = $region17
    $region16: #{vae_forward.1} parent=1 // pred_region
      _
    $region17: #{vae_forward.1} parent=1 // pred_fallthru
      _
    // Predicated region
    $region18: #{vae_forward.1} parent=1 // pred_check
      _
    $region19: #{vae_forward.1} parent=1 // pred_check_branch
      %46 = sbr.rel (0) target = $region21
    $region20: #{vae_forward.1} parent=1 // pred_region
      %48 = vsyncadd [#allocation5], 0
      %s49 = sshll.u32 %s4, 4
      %s50 = int_to_ptr.hbm [resolvable:$true] %s49
      %s51 = sshll.u32 [#allocation4], 4
      %s52 = int_to_ptr.vmem [resolvable:$true] %s51
      %57 = dma.hbm_to_vmem [thread:$0]  %s50, 2048, %s52, [#allocation5], 64, 64, 4
    $region21: #{vae_forward.1} parent=1 // pred_fallthru
      _
    // Predicated region
    $region22: #{vae_forward.1} parent=1 // pred_check
      _
    $region23: #{vae_forward.1} parent=1 // pred_check_branch
      %59 = sbr.rel (0) target = $region25
    $region24: #{vae_forward.1} parent=1 // pred_region
      _
    $region25: #{vae_forward.1} parent=1 // pred_fallthru
      _
    // Predicated region
    $region26: #{vae_forward.1} parent=1 // pred_check
      _
    $region27: #{vae_forward.1} parent=1 // pred_check_branch
      %61 = sbr.rel (0) target = $region29
    $region28: #{vae_forward.1} parent=1 // pred_region
      %63 = vsyncadd [#allocation5], 0
      %s64 = sshll.u32 %s6, 4
      %s65 = int_to_ptr.hbm [resolvable:$true] %s64
      %s66 = sshll.u32 [#allocation6], 4
      %s67 = int_to_ptr.vmem [resolvable:$true] %s66
      %72 = dma.hbm_to_vmem [thread:$0]  %s65, 4096, %s67, [#allocation5], 256, 256, 16
    $region29: #{vae_forward.1} parent=1 // pred_fallthru
      _
    // Predicated region
    $region30: #{vae_forward.1} parent=1 // pred_check
      _
    $region31: #{vae_forward.1} parent=1 // pred_check_branch
      %74 = sbr.rel (0) target = $region33
    $region32: #{vae_forward.1} parent=1 // pred_region
      _
    $region33: #{vae_forward.1} parent=1 // pred_fallthru
      _
    // Predicated region
    $region34: #{vae_forward.1} parent=1 // pred_check
      _
    $region35: #{vae_forward.1} parent=1 // pred_check_branch
      %76 = sbr.rel (0) target = $region37
    $region36: #{vae_forward.1} parent=1 // pred_region
      %78 = vsyncadd [#allocation8], 0
      %s79 = sshll.u32 %s8, 4
      %s80 = int_to_ptr.hbm [resolvable:$true] %s79
      %s81 = sshll.u32 [#allocation7], 4
      %s82 = int_to_ptr.vmem [resolvable:$true] %s81
      %87 = dma.hbm_to_vmem [thread:$0]  %s80, 1024, %s82, [#allocation8], 64, 64, 4
    $region37: #{vae_forward.1} parent=1 // pred_fallthru
      _
    // Predicated region
    $region38: #{vae_forward.1} parent=1 // pred_check
      _
    $region39: #{vae_forward.1} parent=1 // pred_check_branch
      %89 = sbr.rel (0) target = $region41
    $region40: #{vae_forward.1} parent=1 // pred_region
      _
    $region41: #{vae_forward.1} parent=1 // pred_fallthru
      _
    // Predicated region
    $region42: #{vae_forward.1} parent=1 // pred_check
      _
    $region43: #{vae_forward.1} parent=1 // pred_check_branch
      %91 = sbr.rel (0) target = $region45
    $region44: #{vae_forward.1} parent=1 // pred_region
      %93 = vsyncadd [#allocation8], 0
      %s94 = sshll.u32 %s10, 4
      %s95 = int_to_ptr.hbm [resolvable:$true] %s94
      %s96 = sshll.u32 [#allocation9], 4
      %s97 = int_to_ptr.vmem [resolvable:$true] %s96
      %102 = dma.hbm_to_vmem [thread:$0]  %s95, 2048, %s97, [#allocation8], 128, 128, 8
    $region45: #{vae_forward.1} parent=1 // pred_fallthru
      _
    // Predicated region
    $region46: #{vae_forward.1} parent=1 // pred_check
      _
    $region47: #{vae_forward.1} parent=1 // pred_check_branch
      %104 = sbr.rel (0) target = $region49
    $region48: #{vae_forward.1} parent=1 // pred_region
      _
    $region49: #{vae_forward.1} parent=1 // pred_fallthru
      _
    // Predicated region
    $region50: #{vae_forward.1} parent=1 // pred_check
      _
    $region51: #{vae_forward.1} parent=1 // pred_check_branch
      %106 = sbr.rel (0) target = $region53
    $region52: #{vae_forward.1} parent=1 // pred_region
      %108 = vsyncadd [#allocation11], 0
      %s109 = sshll.u32 %s12, 4
      %s110 = int_to_ptr.hbm [resolvable:$true] %s109
      %s111 = sshll.u32 [#allocation10], 4
      %s112 = int_to_ptr.vmem [resolvable:$true] %s111
      %117 = dma.hbm_to_vmem [thread:$0]  %s110, 2048, %s112, [#allocation11], 64, 64, 4
    $region53: #{vae_forward.1} parent=1 // pred_fallthru
      _
    // Predicated region
    $region54: #{vae_forward.1} parent=1 // pred_check
      _
    $region55: #{vae_forward.1} parent=1 // pred_check_branch
      %119 = sbr.rel (0) target = $region57
    $region56: #{vae_forward.1} parent=1 // pred_region
      _
    $region57: #{vae_forward.1} parent=1 // pred_fallthru
      _
    // Predicated region
    $region58: #{vae_forward.1} parent=1 // pred_check
      _
    $region59: #{vae_forward.1} parent=1 // pred_check_branch
      %121 = sbr.rel (0) target = $region61
    $region60: #{vae_forward.1} parent=1 // pred_region
      %123 = dma.done [#allocation3], 2048
    $region61: #{vae_forward.1} parent=1 // pred_fallthru
      _
    // Predicated region
    $region62: #{vae_forward.1} parent=1 // pred_check
      _
    $region63: #{vae_forward.1} parent=1 // pred_check_branch
      %125 = sbr.rel (0) target = $region65
    $region64: #{vae_forward.1} parent=1 // pred_region
      %127 = dma.done [#allocation5], 2048
    $region65: #{vae_forward.1} parent=1 // pred_fallthru
      _
    // Predicated region
    $region66: #{vae_forward.1} parent=1 // pred_check
      _
    $region67: #{vae_forward.1} parent=1 // pred_check_branch
      %129 = sbr.rel (0) target = $region69
    $region68: #{vae_forward.1} parent=1 // pred_region
      %131 = dma.done [#allocation5], 4096
    $region69: #{vae_forward.1} parent=1 // pred_fallthru
      _
    // Predicated region
    $region70: #{vae_forward.1} parent=1 // pred_check
      _
    $region71: #{vae_forward.1} parent=1 // pred_check_branch
      %133 = sbr.rel (0) target = $region73
    $region72: #{vae_forward.1} parent=1 // pred_region
      %135 = dma.done [#allocation8], 1024
    $region73: #{vae_forward.1} parent=1 // pred_fallthru
      _
    // Predicated region
    $region74: #{vae_forward.1} parent=1 // pred_check
      _
    $region75: #{vae_forward.1} parent=1 // pred_check_branch
      %137 = sbr.rel (0) target = $region77
    $region76: #{vae_forward.1} parent=1 // pred_region
      %139 = dma.done [#allocation8], 2048
    $region77: #{vae_forward.1} parent=1 // pred_fallthru
      _
    // Predicated region
    $region78: #{vae_forward.1} parent=1 // pred_check
      _
    $region79: #{vae_forward.1} parent=1 // pred_check_branch
      %141 = sbr.rel (0) target = $region81
    $region80: #{vae_forward.1} parent=1 // pred_region
      %143 = dma.done [#allocation11], 2048
    $region81: #{vae_forward.1} parent=1 // pred_fallthru
      _
    %v144 = vld [vmem:[%s0] sm:$0xf]
    %v145 = vld [vmem:[%s0 + $0x4] sm:$0xf]
    %v146 = vld [vmem:[#allocation2] sm:$0xff]
    %v147 = vld [vmem:[#allocation2 + $0x8] sm:$0xff]
    %v148 = vld [vmem:[#allocation2 + $0x10] sm:$0xff]
    %v149 = vld [vmem:[#allocation2 + $0x18] sm:$0xff]
    %v150 = vld [vmem:[#allocation2 + $0x20] sm:$0xff]
    %v151 = vld [vmem:[#allocation2 + $0x28] sm:$0xff]
    %v152 = vld [vmem:[#allocation2 + $0x30] sm:$0xff]
    %v153 = vld [vmem:[#allocation2 + $0x38] sm:$0xff]
    %v154 = vld [vmem:[#allocation2 + $0x40] sm:$0xff]
    %v155 = vld [vmem:[#allocation2 + $0x48] sm:$0xff]
    %v156 = vld [vmem:[#allocation2 + $0x50] sm:$0xff]
    %v157 = vld [vmem:[#allocation2 + $0x58] sm:$0xff]
    %v158 = vld [vmem:[#allocation2 + $0x60] sm:$0xff]
    %v159 = vld [vmem:[#allocation2 + $0x68] sm:$0xff]
    %v160 = vld [vmem:[#allocation2 + $0x70] sm:$0xff]
    %v161 = vld [vmem:[#allocation2 + $0x78] sm:$0xff]
    %v162 = vld [vmem:[%s3] sm:$0x3]
    %v164 = vperm.slane %v162, 0
    %v165 = vperm.slane %v162, 1
    %v170 = vunpack.c.l.b16 %v144
    %v171 = vunpack.c.l.b16 %v145
    %v172 = vpack.c.b16 %v171, %v170
    %v190 = vunpack.c.l.b16 %v146
    %v191 = vunpack.c.h.b16 %v146
    %v192 = vunpack.c.l.b16 %v147
    %v193 = vunpack.c.h.b16 %v147
    %v194 = vunpack.c.l.b16 %v148
    %v195 = vunpack.c.h.b16 %v148
    %v196 = vunpack.c.l.b16 %v149
    %v197 = vunpack.c.h.b16 %v149
    %v198 = vunpack.c.l.b16 %v150
    %v199 = vunpack.c.h.b16 %v150
    %v200 = vunpack.c.l.b16 %v151
    %v201 = vunpack.c.h.b16 %v151
    %v202 = vunpack.c.l.b16 %v152
    %v203 = vunpack.c.h.b16 %v152
    %v204 = vunpack.c.l.b16 %v153
    %v205 = vunpack.c.h.b16 %v153
    %v206 = vunpack.c.l.b16 %v154
    %v207 = vunpack.c.h.b16 %v154
    %v208 = vunpack.c.l.b16 %v155
    %v209 = vunpack.c.h.b16 %v155
    %v210 = vunpack.c.l.b16 %v156
    %v211 = vunpack.c.h.b16 %v156
    %v212 = vunpack.c.l.b16 %v157
    %v213 = vunpack.c.h.b16 %v157
    %v214 = vunpack.c.l.b16 %v158
    %v215 = vunpack.c.h.b16 %v158
    %v216 = vunpack.c.l.b16 %v159
    %v217 = vunpack.c.h.b16 %v159
    %v218 = vunpack.c.l.b16 %v160
    %v219 = vunpack.c.h.b16 %v160
    %v220 = vunpack.c.l.b16 %v161
    %v221 = vunpack.c.h.b16 %v161
    %v222 = vpack.c.b16 %v192, %v190
    %v223 = vpack.c.b16 %v193, %v191
    %v224 = vpack.c.b16 %v196, %v194
    %v225 = vpack.c.b16 %v197, %v195
    %v226 = vpack.c.b16 %v200, %v198
    %v227 = vpack.c.b16 %v201, %v199
    %v228 = vpack.c.b16 %v204, %v202
    %v229 = vpack.c.b16 %v205, %v203
    %v230 = vpack.c.b16 %v208, %v206
    %v231 = vpack.c.b16 %v209, %v207
    %v232 = vpack.c.b16 %v212, %v210
    %v233 = vpack.c.b16 %v213, %v211
    %v234 = vpack.c.b16 %v216, %v214
    %v235 = vpack.c.b16 %v217, %v215
    %v236 = vpack.c.b16 %v220, %v218
    %v237 = vpack.c.b16 %v221, %v219
    %254 = vmatpush.bf16.msra.mxu0 %v236
    %255 = vmatpush.bf16.msra.mxu0 %v234
    %256 = vmatpush.bf16.msra.mxu0 %v232
    %257 = vmatpush.bf16.msra.mxu0 %v230
    %258 = vmatpush.bf16.msra.mxu0 %v228
    %259 = vmatpush.bf16.msra.mxu0 %v226
    %260 = vmatpush.bf16.msra.mxu0 %v224
    %261 = vmatpush.bf16.msra.mxu0 %v222
    %262 = vmatmul.bf16.gmra.mxu0 %v172
    %v263 = vpop.f32.mrf.mxu0
    %v264 = vadd.f32 %v164, %v263
    %v265 = vpop.f32.mrf.mxu0
    %v266 = vadd.f32 %v164, %v265
    %267 = vdwg.mxu0
    %268 = vmatpush.bf16.msra.mxu0 %v237
    %269 = vmatpush.bf16.msra.mxu0 %v235
    %270 = vmatpush.bf16.msra.mxu0 %v233
    %271 = vmatpush.bf16.msra.mxu0 %v231
    %272 = vmatpush.bf16.msra.mxu0 %v229
    %273 = vmatpush.bf16.msra.mxu0 %v227
    %274 = vmatpush.bf16.msra.mxu0 %v225
    %275 = vmatpush.bf16.msra.mxu0 %v223
    %276 = vmatmul.bf16.gmra.mxu0 %v172
    %v277 = vpop.f32.mrf.mxu0
    %v278 = vadd.f32 %v165, %v277
    %v279 = vpop.f32.mrf.mxu0
    %v280 = vadd.f32 %v165, %v279
    %281 = vdwg.mxu0
    %v282 = vmax.f32 %v264, 0.0
    %v283 = vmax.f32 %v278, 0.0
    %v284 = vmax.f32 %v266, 0.0
    %v285 = vmax.f32 %v280, 0.0
    %v286 = vpack.c.bf16 %v284, %v282
    %v287 = vpack.c.bf16 %v285, %v283
    %v288 = vld [vmem:[#allocation4] sm:$0xf]
    %v289 = vld [vmem:[#allocation4 + $0x4] sm:$0xf]
    %v290 = vld [vmem:[#allocation4 + $0x8] sm:$0xf]
    %v291 = vld [vmem:[#allocation4 + $0xc] sm:$0xf]
    %v292 = vld [vmem:[#allocation4 + $0x10] sm:$0xf]
    %v293 = vld [vmem:[#allocation4 + $0x14] sm:$0xf]
    %v294 = vld [vmem:[#allocation4 + $0x18] sm:$0xf]
    %v295 = vld [vmem:[#allocation4 + $0x1c] sm:$0xf]
    %v296 = vld [vmem:[#allocation4 + $0x20] sm:$0xf]
    %v297 = vld [vmem:[#allocation4 + $0x24] sm:$0xf]
    %v298 = vld [vmem:[#allocation4 + $0x28] sm:$0xf]
    %v299 = vld [vmem:[#allocation4 + $0x2c] sm:$0xf]
    %v300 = vld [vmem:[#allocation4 + $0x30] sm:$0xf]
    %v301 = vld [vmem:[#allocation4 + $0x34] sm:$0xf]
    %v302 = vld [vmem:[#allocation4 + $0x38] sm:$0xf]
    %v303 = vld [vmem:[#allocation4 + $0x3c] sm:$0xf]
    %v304 = vld [vmem:[#allocation4 + $0x40] sm:$0xf]
    %v305 = vld [vmem:[#allocation4 + $0x44] sm:$0xf]
    %v306 = vld [vmem:[#allocation4 + $0x48] sm:$0xf]
    %v307 = vld [vmem:[#allocation4 + $0x4c] sm:$0xf]
    %v308 = vld [vmem:[#allocation4 + $0x50] sm:$0xf]
    %v309 = vld [vmem:[#allocation4 + $0x54] sm:$0xf]
    %v310 = vld [vmem:[#allocation4 + $0x58] sm:$0xf]
    %v311 = vld [vmem:[#allocation4 + $0x5c] sm:$0xf]
    %v312 = vld [vmem:[#allocation4 + $0x60] sm:$0xf]
    %v313 = vld [vmem:[#allocation4 + $0x64] sm:$0xf]
    %v314 = vld [vmem:[#allocation4 + $0x68] sm:$0xf]
    %v315 = vld [vmem:[#allocation4 + $0x6c] sm:$0xf]
    %v316 = vld [vmem:[#allocation4 + $0x70] sm:$0xf]
    %v317 = vld [vmem:[#allocation4 + $0x74] sm:$0xf]
    %v318 = vld [vmem:[#allocation4 + $0x78] sm:$0xf]
    %v319 = vld [vmem:[#allocation4 + $0x7c] sm:$0xf]
    %v320 = vld [vmem:[%s5] sm:$0x1]
    %v322 = vperm.slane %v320, 0
    %v356 = vunpack.c.l.b16 %v288
    %v357 = vunpack.c.l.b16 %v289
    %v358 = vunpack.c.l.b16 %v290
    %v359 = vunpack.c.l.b16 %v291
    %v360 = vunpack.c.l.b16 %v292
    %v361 = vunpack.c.l.b16 %v293
    %v362 = vunpack.c.l.b16 %v294
    %v363 = vunpack.c.l.b16 %v295
    %v364 = vunpack.c.l.b16 %v296
    %v365 = vunpack.c.l.b16 %v297
    %v366 = vunpack.c.l.b16 %v298
    %v367 = vunpack.c.l.b16 %v299
    %v368 = vunpack.c.l.b16 %v300
    %v369 = vunpack.c.l.b16 %v301
    %v370 = vunpack.c.l.b16 %v302
    %v371 = vunpack.c.l.b16 %v303
    %v372 = vunpack.c.l.b16 %v304
    %v373 = vunpack.c.l.b16 %v305
    %v374 = vunpack.c.l.b16 %v306
    %v375 = vunpack.c.l.b16 %v307
    %v376 = vunpack.c.l.b16 %v308
    %v377 = vunpack.c.l.b16 %v309
    %v378 = vunpack.c.l.b16 %v310
    %v379 = vunpack.c.l.b16 %v311
    %v380 = vunpack.c.l.b16 %v312
    %v381 = vunpack.c.l.b16 %v313
    %v382 = vunpack.c.l.b16 %v314
    %v383 = vunpack.c.l.b16 %v315
    %v384 = vunpack.c.l.b16 %v316
    %v385 = vunpack.c.l.b16 %v317
    %v386 = vunpack.c.l.b16 %v318
    %v387 = vunpack.c.l.b16 %v319
    %v388 = vpack.c.b16 %v357, %v356
    %v389 = vpack.c.b16 %v359, %v358
    %v390 = vpack.c.b16 %v361, %v360
    %v391 = vpack.c.b16 %v363, %v362
    %v392 = vpack.c.b16 %v365, %v364
    %v393 = vpack.c.b16 %v367, %v366
    %v394 = vpack.c.b16 %v369, %v368
    %v395 = vpack.c.b16 %v371, %v370
    %v396 = vpack.c.b16 %v373, %v372
    %v397 = vpack.c.b16 %v375, %v374
    %v398 = vpack.c.b16 %v377, %v376
    %v399 = vpack.c.b16 %v379, %v378
    %v400 = vpack.c.b16 %v381, %v380
    %v401 = vpack.c.b16 %v383, %v382
    %v402 = vpack.c.b16 %v385, %v384
    %v403 = vpack.c.b16 %v387, %v386
    %420 = vmatpush.bf16.msra.mxu0 %v395
    %421 = vmatpush.bf16.msra.mxu0 %v394
    %422 = vmatpush.bf16.msra.mxu0 %v393
    %423 = vmatpush.bf16.msra.mxu0 %v392
    %424 = vmatpush.bf16.msra.mxu0 %v391
    %425 = vmatpush.bf16.msra.mxu0 %v390
    %426 = vmatpush.bf16.msra.mxu0 %v389
    %427 = vmatpush.bf16.msra.mxu0 %v388
    %428 = vmatmul.bf16.gmra.mxu0 %v286
    %v429 = vpop.f32.mrf.mxu0
    %v430 = vadd.f32 %v322, %v429
    %v431 = vpop.f32.mrf.mxu0
    %v432 = vadd.f32 %v322, %v431
    %433 = vdwg.mxu0
    %434 = vmatpush.bf16.msra.mxu0 %v403
    %435 = vmatpush.bf16.msra.mxu0 %v402
    %436 = vmatpush.bf16.msra.mxu0 %v401
    %437 = vmatpush.bf16.msra.mxu0 %v400
    %438 = vmatpush.bf16.msra.mxu0 %v399
    %439 = vmatpush.bf16.msra.mxu0 %v398
    %440 = vmatpush.bf16.msra.mxu0 %v397
    %441 = vmatpush.bf16.msra.mxu0 %v396
    %442 = vmatmul.bf16.gmra.mxu0 %v287
    %v443 = vpop.f32.mrf.mxu0
    %v444 = vadd.f32 %v430, %v443
    %v445 = vpop.f32.mrf.mxu0
    %v446 = vadd.f32 %v432, %v445
    %447 = vdwg.mxu0
    %v448 = vmax.f32 %v444, 0.0
    %v449 = vmax.f32 %v446, 0.0
    %v450 = vld [vmem:[#allocation6] sm:$0xff]
    %v451 = vld [vmem:[#allocation6 + $0x8] sm:$0xff]
    %v452 = vld [vmem:[#allocation6 + $0x10] sm:$0xff]
    %v453 = vld [vmem:[#allocation6 + $0x18] sm:$0xff]
    %v454 = vld [vmem:[#allocation6 + $0x20] sm:$0xff]
    %v455 = vld [vmem:[#allocation6 + $0x28] sm:$0xff]
    %v456 = vld [vmem:[#allocation6 + $0x30] sm:$0xff]
    %v457 = vld [vmem:[#allocation6 + $0x38] sm:$0xff]
    %v458 = vld [vmem:[#allocation6 + $0x40] sm:$0xff]
    %v459 = vld [vmem:[#allocation6 + $0x48] sm:$0xff]
    %v460 = vld [vmem:[#allocation6 + $0x50] sm:$0xff]
    %v461 = vld [vmem:[#allocation6 + $0x58] sm:$0xff]
    %v462 = vld [vmem:[#allocation6 + $0x60] sm:$0xff]
    %v463 = vld [vmem:[#allocation6 + $0x68] sm:$0xff]
    %v464 = vld [vmem:[#allocation6 + $0x70] sm:$0xff]
    %v465 = vld [vmem:[#allocation6 + $0x78] sm:$0xff]
    %v466 = vld [vmem:[#allocation6 + $0x80] sm:$0xff]
    %v467 = vld [vmem:[#allocation6 + $0x88] sm:$0xff]
    %v468 = vld [vmem:[#allocation6 + $0x90] sm:$0xff]
    %v469 = vld [vmem:[#allocation6 + $0x98] sm:$0xff]
    %v470 = vld [vmem:[#allocation6 + $0xa0] sm:$0xff]
    %v471 = vld [vmem:[#allocation6 + $0xa8] sm:$0xff]
    %v472 = vld [vmem:[#allocation6 + $0xb0] sm:$0xff]
    %v473 = vld [vmem:[#allocation6 + $0xb8] sm:$0xff]
    %v474 = vld [vmem:[#allocation6 + $0xc0] sm:$0xff]
    %v475 = vld [vmem:[#allocation6 + $0xc8] sm:$0xff]
    %v476 = vld [vmem:[#allocation6 + $0xd0] sm:$0xff]
    %v477 = vld [vmem:[#allocation6 + $0xd8] sm:$0xff]
    %v478 = vld [vmem:[#allocation6 + $0xe0] sm:$0xff]
    %v479 = vld [vmem:[#allocation6 + $0xe8] sm:$0xff]
    %v480 = vld [vmem:[#allocation6 + $0xf0] sm:$0xff]
    %v481 = vld [vmem:[#allocation6 + $0xf8] sm:$0xff]
    %v482 = vld [vmem:[%s7] sm:$0x3]
    %v484 = vperm.slane %v482, 0
    %v485 = vperm.slane %v482, 1
    %488 = vmatpush.msra.mxu0 %v480
    %489 = vmatpush.msra.mxu0 %v478
    %490 = vmatpush.msra.mxu0 %v476
    %491 = vmatpush.msra.mxu0 %v474
    %492 = vmatpush.msra.mxu0 %v472
    %493 = vmatpush.msra.mxu0 %v470
    %494 = vmatpush.msra.mxu0 %v468
    %495 = vmatpush.msra.mxu0 %v466
    %496 = vmatpush.msra.mxu0 %v464
    %497 = vmatpush.msra.mxu0 %v462
    %498 = vmatpush.msra.mxu0 %v460
    %499 = vmatpush.msra.mxu0 %v458
    %500 = vmatpush.msra.mxu0 %v456
    %501 = vmatpush.msra.mxu0 %v454
    %502 = vmatpush.msra.mxu0 %v452
    %503 = vmatpush.msra.mxu0 %v450
    %504 = vmatmul.f32.gmra.mxu0 %v448
    %v505 = vpop.f32.mrf.mxu0
    %v506 = vadd.f32 %v484, %v505
    %507 = vmatmul.f32.gmra.mxu0 %v449
    %v508 = vpop.f32.mrf.mxu0
    %v509 = vadd.f32 %v484, %v508
    %510 = vdwg.mxu0
    %511 = vmatpush.msra.mxu0 %v481
    %512 = vmatpush.msra.mxu0 %v479
    %513 = vmatpush.msra.mxu0 %v477
    %514 = vmatpush.msra.mxu0 %v475
    %515 = vmatpush.msra.mxu0 %v473
    %516 = vmatpush.msra.mxu0 %v471
    %517 = vmatpush.msra.mxu0 %v469
    %518 = vmatpush.msra.mxu0 %v467
    %519 = vmatpush.msra.mxu0 %v465
    %520 = vmatpush.msra.mxu0 %v463
    %521 = vmatpush.msra.mxu0 %v461
    %522 = vmatpush.msra.mxu0 %v459
    %523 = vmatpush.msra.mxu0 %v457
    %524 = vmatpush.msra.mxu0 %v455
    %525 = vmatpush.msra.mxu0 %v453
    %526 = vmatpush.msra.mxu0 %v451
    %527 = vmatmul.f32.gmra.mxu0 %v448
    %v528 = vpop.f32.mrf.mxu0
    %v529 = vadd.f32 %v485, %v528
    %530 = vmatmul.f32.gmra.mxu0 %v449
    %v531 = vpop.f32.mrf.mxu0
    %v532 = vadd.f32 %v485, %v531
    %533 = vdwg.mxu0
    %v534 = vmul.f32 %v529, 0.5
    %v535 = vmul.f32 %v532, 0.5
    %v536 = vmul.f32 %v534, 1.442695
    %v537 = vpow.pop %v536
    %v538 = vmul.f32 %v535, 1.442695
    %v539 = vpow.pop %v538
    %v540 = vld [vmem:[%s1] sm:$0xf]
    %v541 = vld [vmem:[%s1 + $0x4] sm:$0xf]
    %v542 = vunpack.c.l.bf16 %v540
    %v543 = vunpack.c.l.bf16 %v541
    %v544 = vmul.f32 %v542, %v537
    %v545 = vmul.f32 %v543, %v539
    %v546 = vadd.f32 %v506, %v544
    %v547 = vadd.f32 %v509, %v545
    %v548 = vpack.c.bf16 %v547, %v546
    %v549 = vld [vmem:[#allocation7] sm:$0xf]
    %v550 = vld [vmem:[#allocation7 + $0x4] sm:$0xf]
    %v551 = vld [vmem:[#allocation7 + $0x8] sm:$0xf]
    %v552 = vld [vmem:[#allocation7 + $0xc] sm:$0xf]
    %v553 = vld [vmem:[#allocation7 + $0x10] sm:$0xf]
    %v554 = vld [vmem:[#allocation7 + $0x14] sm:$0xf]
    %v555 = vld [vmem:[#allocation7 + $0x18] sm:$0xf]
    %v556 = vld [vmem:[#allocation7 + $0x1c] sm:$0xf]
    %v557 = vld [vmem:[#allocation7 + $0x20] sm:$0xf]
    %v558 = vld [vmem:[#allocation7 + $0x24] sm:$0xf]
    %v559 = vld [vmem:[#allocation7 + $0x28] sm:$0xf]
    %v560 = vld [vmem:[#allocation7 + $0x2c] sm:$0xf]
    %v561 = vld [vmem:[#allocation7 + $0x30] sm:$0xf]
    %v562 = vld [vmem:[#allocation7 + $0x34] sm:$0xf]
    %v563 = vld [vmem:[#allocation7 + $0x38] sm:$0xf]
    %v564 = vld [vmem:[#allocation7 + $0x3c] sm:$0xf]
    %v565 = vld [vmem:[%s9] sm:$0x1]
    %v567 = vperm.slane %v565, 0
    %v585 = vunpack.c.l.b16 %v549
    %v586 = vunpack.c.l.b16 %v550
    %v587 = vunpack.c.l.b16 %v551
    %v588 = vunpack.c.l.b16 %v552
    %v589 = vunpack.c.l.b16 %v553
    %v590 = vunpack.c.l.b16 %v554
    %v591 = vunpack.c.l.b16 %v555
    %v592 = vunpack.c.l.b16 %v556
    %v593 = vunpack.c.l.b16 %v557
    %v594 = vunpack.c.l.b16 %v558
    %v595 = vunpack.c.l.b16 %v559
    %v596 = vunpack.c.l.b16 %v560
    %v597 = vunpack.c.l.b16 %v561
    %v598 = vunpack.c.l.b16 %v562
    %v599 = vunpack.c.l.b16 %v563
    %v600 = vunpack.c.l.b16 %v564
    %v601 = vpack.c.b16 %v586, %v585
    %v602 = vpack.c.b16 %v588, %v587
    %v603 = vpack.c.b16 %v590, %v589
    %v604 = vpack.c.b16 %v592, %v591
    %v605 = vpack.c.b16 %v594, %v593
    %v606 = vpack.c.b16 %v596, %v595
    %v607 = vpack.c.b16 %v598, %v597
    %v608 = vpack.c.b16 %v600, %v599
    %617 = vmatpush.bf16.msra.mxu0 %v608
    %618 = vmatpush.bf16.msra.mxu0 %v607
    %619 = vmatpush.bf16.msra.mxu0 %v606
    %620 = vmatpush.bf16.msra.mxu0 %v605
    %621 = vmatpush.bf16.msra.mxu0 %v604
    %622 = vmatpush.bf16.msra.mxu0 %v603
    %623 = vmatpush.bf16.msra.mxu0 %v602
    %624 = vmatpush.bf16.msra.mxu0 %v601
    %625 = vmatmul.bf16.gmra.mxu0 %v548
    %v626 = vpop.f32.mrf.mxu0
    %v627 = vadd.f32 %v567, %v626
    %v628 = vpop.f32.mrf.mxu0
    %v629 = vadd.f32 %v567, %v628
    %630 = vdwg.mxu0
    %v631 = vmax.f32 %v627, 0.0
    %v632 = vmax.f32 %v629, 0.0
    %v633 = vpack.c.bf16 %v632, %v631
    %v634 = vld [vmem:[#allocation9] sm:$0xff]
    %v635 = vld [vmem:[#allocation9 + $0x8] sm:$0xff]
    %v636 = vld [vmem:[#allocation9 + $0x10] sm:$0xff]
    %v637 = vld [vmem:[#allocation9 + $0x18] sm:$0xff]
    %v638 = vld [vmem:[#allocation9 + $0x20] sm:$0xff]
    %v639 = vld [vmem:[#allocation9 + $0x28] sm:$0xff]
    %v640 = vld [vmem:[#allocation9 + $0x30] sm:$0xff]
    %v641 = vld [vmem:[#allocation9 + $0x38] sm:$0xff]
    %v642 = vld [vmem:[#allocation9 + $0x40] sm:$0xff]
    %v643 = vld [vmem:[#allocation9 + $0x48] sm:$0xff]
    %v644 = vld [vmem:[#allocation9 + $0x50] sm:$0xff]
    %v645 = vld [vmem:[#allocation9 + $0x58] sm:$0xff]
    %v646 = vld [vmem:[#allocation9 + $0x60] sm:$0xff]
    %v647 = vld [vmem:[#allocation9 + $0x68] sm:$0xff]
    %v648 = vld [vmem:[#allocation9 + $0x70] sm:$0xff]
    %v649 = vld [vmem:[#allocation9 + $0x78] sm:$0xff]
    %v650 = vld [vmem:[%s11] sm:$0x3]
    %v652 = vperm.slane %v650, 0
    %v653 = vperm.slane %v650, 1
    %v672 = vunpack.c.l.b16 %v634
    %v673 = vunpack.c.h.b16 %v634
    %v674 = vunpack.c.l.b16 %v635
    %v675 = vunpack.c.h.b16 %v635
    %v676 = vunpack.c.l.b16 %v636
    %v677 = vunpack.c.h.b16 %v636
    %v678 = vunpack.c.l.b16 %v637
    %v679 = vunpack.c.h.b16 %v637
    %v680 = vunpack.c.l.b16 %v638
    %v681 = vunpack.c.h.b16 %v638
    %v682 = vunpack.c.l.b16 %v639
    %v683 = vunpack.c.h.b16 %v639
    %v684 = vunpack.c.l.b16 %v640
    %v685 = vunpack.c.h.b16 %v640
    %v686 = vunpack.c.l.b16 %v641
    %v687 = vunpack.c.h.b16 %v641
    %v688 = vunpack.c.l.b16 %v642
    %v689 = vunpack.c.h.b16 %v642
    %v690 = vunpack.c.l.b16 %v643
    %v691 = vunpack.c.h.b16 %v643
    %v692 = vunpack.c.l.b16 %v644
    %v693 = vunpack.c.h.b16 %v644
    %v694 = vunpack.c.l.b16 %v645
    %v695 = vunpack.c.h.b16 %v645
    %v696 = vunpack.c.l.b16 %v646
    %v697 = vunpack.c.h.b16 %v646
    %v698 = vunpack.c.l.b16 %v647
    %v699 = vunpack.c.h.b16 %v647
    %v700 = vunpack.c.l.b16 %v648
    %v701 = vunpack.c.h.b16 %v648
    %v702 = vunpack.c.l.b16 %v649
    %v703 = vunpack.c.h.b16 %v649
    %v704 = vpack.c.b16 %v674, %v672
    %v705 = vpack.c.b16 %v675, %v673
    %v706 = vpack.c.b16 %v678, %v676
    %v707 = vpack.c.b16 %v679, %v677
    %v708 = vpack.c.b16 %v682, %v680
    %v709 = vpack.c.b16 %v683, %v681
    %v710 = vpack.c.b16 %v686, %v684
    %v711 = vpack.c.b16 %v687, %v685
    %v712 = vpack.c.b16 %v690, %v688
    %v713 = vpack.c.b16 %v691, %v689
    %v714 = vpack.c.b16 %v694, %v692
    %v715 = vpack.c.b16 %v695, %v693
    %v716 = vpack.c.b16 %v698, %v696
    %v717 = vpack.c.b16 %v699, %v697
    %v718 = vpack.c.b16 %v702, %v700
    %v719 = vpack.c.b16 %v703, %v701
    %736 = vmatpush.bf16.msra.mxu0 %v718
    %737 = vmatpush.bf16.msra.mxu0 %v716
    %738 = vmatpush.bf16.msra.mxu0 %v714
    %739 = vmatpush.bf16.msra.mxu0 %v712
    %740 = vmatpush.bf16.msra.mxu0 %v710
    %741 = vmatpush.bf16.msra.mxu0 %v708
    %742 = vmatpush.bf16.msra.mxu0 %v706
    %743 = vmatpush.bf16.msra.mxu0 %v704
    %744 = vmatmul.bf16.gmra.mxu0 %v633
    %v745 = vpop.f32.mrf.mxu0
    %v746 = vadd.f32 %v652, %v745
    %v747 = vpop.f32.mrf.mxu0
    %v748 = vadd.f32 %v652, %v747
    %749 = vdwg.mxu0
    %750 = vmatpush.bf16.msra.mxu0 %v719
    %751 = vmatpush.bf16.msra.mxu0 %v717
    %752 = vmatpush.bf16.msra.mxu0 %v715
    %753 = vmatpush.bf16.msra.mxu0 %v713
    %754 = vmatpush.bf16.msra.mxu0 %v711
    %755 = vmatpush.bf16.msra.mxu0 %v709
    %756 = vmatpush.bf16.msra.mxu0 %v707
    %757 = vmatpush.bf16.msra.mxu0 %v705
    %758 = vmatmul.bf16.gmra.mxu0 %v633
    %v759 = vpop.f32.mrf.mxu0
    %v760 = vadd.f32 %v653, %v759
    %v761 = vpop.f32.mrf.mxu0
    %v762 = vadd.f32 %v653, %v761
    %763 = vdwg.mxu0
    %v764 = vmax.f32 %v746, 0.0
    %v765 = vmax.f32 %v760, 0.0
    %v766 = vmax.f32 %v748, 0.0
    %v767 = vmax.f32 %v762, 0.0
    %v768 = vpack.c.bf16 %v766, %v764
    %v769 = vpack.c.bf16 %v767, %v765
    %v770 = vld [vmem:[#allocation10] sm:$0xf]
    %v771 = vld [vmem:[#allocation10 + $0x4] sm:$0xf]
    %v772 = vld [vmem:[#allocation10 + $0x8] sm:$0xf]
    %v773 = vld [vmem:[#allocation10 + $0xc] sm:$0xf]
    %v774 = vld [vmem:[#allocation10 + $0x10] sm:$0xf]
    %v775 = vld [vmem:[#allocation10 + $0x14] sm:$0xf]
    %v776 = vld [vmem:[#allocation10 + $0x18] sm:$0xf]
    %v777 = vld [vmem:[#allocation10 + $0x1c] sm:$0xf]
    %v778 = vld [vmem:[#allocation10 + $0x20] sm:$0xf]
    %v779 = vld [vmem:[#allocation10 + $0x24] sm:$0xf]
    %v780 = vld [vmem:[#allocation10 + $0x28] sm:$0xf]
    %v781 = vld [vmem:[#allocation10 + $0x2c] sm:$0xf]
    %v782 = vld [vmem:[#allocation10 + $0x30] sm:$0xf]
    %v783 = vld [vmem:[#allocation10 + $0x34] sm:$0xf]
    %v784 = vld [vmem:[#allocation10 + $0x38] sm:$0xf]
    %v785 = vld [vmem:[#allocation10 + $0x3c] sm:$0xf]
    %v786 = vld [vmem:[#allocation10 + $0x40] sm:$0xf]
    %v787 = vld [vmem:[#allocation10 + $0x44] sm:$0xf]
    %v788 = vld [vmem:[#allocation10 + $0x48] sm:$0xf]
    %v789 = vld [vmem:[#allocation10 + $0x4c] sm:$0xf]
    %v790 = vld [vmem:[#allocation10 + $0x50] sm:$0xf]
    %v791 = vld [vmem:[#allocation10 + $0x54] sm:$0xf]
    %v792 = vld [vmem:[#allocation10 + $0x58] sm:$0xf]
    %v793 = vld [vmem:[#allocation10 + $0x5c] sm:$0xf]
    %v794 = vld [vmem:[#allocation10 + $0x60] sm:$0xf]
    %v795 = vld [vmem:[#allocation10 + $0x64] sm:$0xf]
    %v796 = vld [vmem:[#allocation10 + $0x68] sm:$0xf]
    %v797 = vld [vmem:[#allocation10 + $0x6c] sm:$0xf]
    %v798 = vld [vmem:[#allocation10 + $0x70] sm:$0xf]
    %v799 = vld [vmem:[#allocation10 + $0x74] sm:$0xf]
    %v800 = vld [vmem:[#allocation10 + $0x78] sm:$0xf]
    %v801 = vld [vmem:[#allocation10 + $0x7c] sm:$0xf]
    %v802 = vld [vmem:[%s13] sm:$0x1]
    %v804 = vperm.slane %v802, 0
    %v838 = vunpack.c.l.b16 %v770
    %v839 = vunpack.c.l.b16 %v771
    %v840 = vunpack.c.l.b16 %v772
    %v841 = vunpack.c.l.b16 %v773
    %v842 = vunpack.c.l.b16 %v774
    %v843 = vunpack.c.l.b16 %v775
    %v844 = vunpack.c.l.b16 %v776
    %v845 = vunpack.c.l.b16 %v777
    %v846 = vunpack.c.l.b16 %v778
    %v847 = vunpack.c.l.b16 %v779
    %v848 = vunpack.c.l.b16 %v780
    %v849 = vunpack.c.l.b16 %v781
    %v850 = vunpack.c.l.b16 %v782
    %v851 = vunpack.c.l.b16 %v783
    %v852 = vunpack.c.l.b16 %v784
    %v853 = vunpack.c.l.b16 %v785
    %v854 = vunpack.c.l.b16 %v786
    %v855 = vunpack.c.l.b16 %v787
    %v856 = vunpack.c.l.b16 %v788
    %v857 = vunpack.c.l.b16 %v789
    %v858 = vunpack.c.l.b16 %v790
    %v859 = vunpack.c.l.b16 %v791
    %v860 = vunpack.c.l.b16 %v792
    %v861 = vunpack.c.l.b16 %v793
    %v862 = vunpack.c.l.b16 %v794
    %v863 = vunpack.c.l.b16 %v795
    %v864 = vunpack.c.l.b16 %v796
    %v865 = vunpack.c.l.b16 %v797
    %v866 = vunpack.c.l.b16 %v798
    %v867 = vunpack.c.l.b16 %v799
    %v868 = vunpack.c.l.b16 %v800
    %v869 = vunpack.c.l.b16 %v801
    %v870 = vpack.c.b16 %v839, %v838
    %v871 = vpack.c.b16 %v841, %v840
    %v872 = vpack.c.b16 %v843, %v842
    %v873 = vpack.c.b16 %v845, %v844
    %v874 = vpack.c.b16 %v847, %v846
    %v875 = vpack.c.b16 %v849, %v848
    %v876 = vpack.c.b16 %v851, %v850
    %v877 = vpack.c.b16 %v853, %v852
    %v878 = vpack.c.b16 %v855, %v854
    %v879 = vpack.c.b16 %v857, %v856
    %v880 = vpack.c.b16 %v859, %v858
    %v881 = vpack.c.b16 %v861, %v860
    %v882 = vpack.c.b16 %v863, %v862
    %v883 = vpack.c.b16 %v865, %v864
    %v884 = vpack.c.b16 %v867, %v866
    %v885 = vpack.c.b16 %v869, %v868
    %902 = vmatpush.bf16.msra.mxu0 %v877
    %903 = vmatpush.bf16.msra.mxu0 %v876
    %904 = vmatpush.bf16.msra.mxu0 %v875
    %905 = vmatpush.bf16.msra.mxu0 %v874
    %906 = vmatpush.bf16.msra.mxu0 %v873
    %907 = vmatpush.bf16.msra.mxu0 %v872
    %908 = vmatpush.bf16.msra.mxu0 %v871
    %909 = vmatpush.bf16.msra.mxu0 %v870
    %910 = vmatmul.bf16.gmra.mxu0 %v768
    %v911 = vpop.f32.mrf.mxu0
    %v912 = vadd.f32 %v804, %v911
    %v913 = vpop.f32.mrf.mxu0
    %v914 = vadd.f32 %v804, %v913
    %915 = vdwg.mxu0
    %916 = vmatpush.bf16.msra.mxu0 %v885
    %917 = vmatpush.bf16.msra.mxu0 %v884
    %918 = vmatpush.bf16.msra.mxu0 %v883
    %919 = vmatpush.bf16.msra.mxu0 %v882
    %920 = vmatpush.bf16.msra.mxu0 %v881
    %921 = vmatpush.bf16.msra.mxu0 %v880
    %922 = vmatpush.bf16.msra.mxu0 %v879
    %923 = vmatpush.bf16.msra.mxu0 %v878
    %924 = vmatmul.bf16.gmra.mxu0 %v769
    %v925 = vpop.f32.mrf.mxu0
    %v926 = vadd.f32 %v912, %v925
    %v927 = vpop.f32.mrf.mxu0
    %v928 = vadd.f32 %v914, %v927
    %929 = vdwg.mxu0
    %v930 = vmul.f32 %v926, 0.5
    %v931 = vmul.f32 %v928, 0.5
    %v932 = vtanh.pop %v930
    %v933 = vtanh.pop %v931
    %v934 = vmul.f32 %v932, 0.5
    %v935 = vmul.f32 %v933, 0.5
    %v936 = vadd.f32 %v934, 0.5
    %v937 = vadd.f32 %v935, 0.5
    %938 = vst [vmem:[%s14] sm:$0xff] %v936
    %939 = vst [vmem:[%s14 + $0x8] sm:$0xff] %v937
    %940 = vst [vmem:[%s15] sm:$0xff] %v506
    %941 = vst [vmem:[%s15 + $0x8] sm:$0xff] %v509
    %942 = vst [vmem:[%s16] sm:$0xff] %v529
    %943 = vst [vmem:[%s16 + $0x8] sm:$0xff] %v532
    // Predicated region
    $region82: #{vae_forward.1} parent=1 // pred_check
      _
    $region83: #{vae_forward.1} parent=1 // pred_check_branch
      %945 = sbr.rel (0) target = $region85
    $region84: #{vae_forward.1} parent=1 // pred_region
      _
    $region85: #{vae_forward.1} parent=1 // pred_fallthru
      _
    // Predicated region
    $region86: #{vae_forward.1} parent=1 // pred_check
      _
    $region87: #{vae_forward.1} parent=1 // pred_check_branch
      %947 = sbr.rel (0) target = $region89
    $region88: #{vae_forward.1} parent=1 // pred_region
      _
    $region89: #{vae_forward.1} parent=1 // pred_fallthru
      _
    // Predicated region
    $region90: #{vae_forward.1} parent=1 // pred_check
      _
    $region91: #{vae_forward.1} parent=1 // pred_check_branch
      %949 = sbr.rel (0) target = $region93
    $region92: #{vae_forward.1} parent=1 // pred_region
      _
    $region93: #{vae_forward.1} parent=1 // pred_fallthru
      _
    // Predicated region
    $region94: #{vae_forward.1} parent=1 // pred_check
      _
    $region95: #{vae_forward.1} parent=1 // pred_check_branch
      %951 = sbr.rel (0) target = $region97
    $region96: #{vae_forward.1} parent=1 // pred_region
      _
    $region97: #{vae_forward.1} parent=1 // pred_fallthru
      _
    // Predicated region
    $region98: #{vae_forward.1} parent=1 // pred_check
      _
    $region99: #{vae_forward.1} parent=1 // pred_check_branch
      %953 = sbr.rel (0) target = $region101
    $region100: #{vae_forward.1} parent=1 // pred_region
      _
    $region101: #{vae_forward.1} parent=1 // pred_fallthru
      _
    // Predicated region
    $region102: #{vae_forward.1} parent=1 // pred_check
      _
    $region103: #{vae_forward.1} parent=1 // pred_check_branch
      %955 = sbr.rel (0) target = $region105
    $region104: #{vae_forward.1} parent=1 // pred_region
      _
    $region105: #{vae_forward.1} parent=1 // pred_fallthru
      _
    %956 = vsyncpa [#allocation3], 1
    %957 = vsyncpa [#allocation5], 1
    %958 = vsyncpa [#allocation8], 1
    %959 = vsyncpa [#allocation11], 1

</llo_original>
